<compile_context>
chip_gen: v5e
topology: v5e:2x2
jax: 0.10.0
libtpu: 0.0.40
codegen_flags: <defaults>
</compile_context>

<pallas_src>
import functools
import math

import jax
import jax.numpy as jnp
from jax.experimental import pallas as pl
from jax.experimental.pallas import tpu as pltpu


def _ls_loss_kernel(x_ref, tgt_ref, out_ref, *,
                    padding_idx, confidence, low, k_const, n_rows, tm):
    i = pl.program_id(0)

    x = x_ref[...].astype(jnp.float32)            # (TM, C), f32 math in-kernel
    tgt = tgt_ref[...]                            # (TM, 1) int32

    # --- stable log-sum-exp (never materialize the full logp tensor) ---
    m = jnp.max(x, axis=-1, keepdims=True)        # (TM, 1)
    z = x - m                                     # (TM, C)
    lse = jnp.log(jnp.sum(jnp.exp(z), axis=-1, keepdims=True))   # (TM, 1)

    # --- weighted sum  sum_c w_c * z_c  with w_c = confidence at tgt, low else ---
    col = jax.lax.broadcasted_iota(jnp.int32, z.shape, 1)
    w = jnp.where(col == tgt, jnp.float32(confidence), jnp.float32(low))
    wz = jnp.sum(w * z, axis=-1, keepdims=True)   # (TM, 1)

    # --- closed-form per-row KL(true_dist || softmax(x)); sum_c w_c == 1 ---
    row_loss = k_const + lse - wz                 # (TM, 1)

    # --- mask padded rows and OOB rows of the remainder tile (select!) ---
    row = jax.lax.broadcasted_iota(jnp.int32, tgt.shape, 0) + i * tm
    valid = jnp.logical_and(row < n_rows, tgt != padding_idx)     # (TM, 1)
    row_loss = jnp.where(valid, row_loss, 0.0)    # OOB NaNs/inf can't leak

    tile_sum = jnp.sum(row_loss)                  # tiny (TM,1) sublane reduce
    out_ref[...] = jnp.broadcast_to(tile_sum, (1, 8, 128))


def label_smoothing_loss(x, target, *, size, padding_idx, smoothing,
                         normalize_length=False, tm=512):
    """x: (B, S, C) float (f32 or bf16), target: (B, S) int -> scalar f32 loss."""
    B, S, C = x.shape
    assert C == size
    N = B * S
    xf = x.reshape(N, C)                          # keep HBM dtype as-is
    tf = target.reshape(N, 1).astype(jnp.int32)

    confidence = 1.0 - smoothing
    low = smoothing / (size - 1)
    k_const = 0.0
    if confidence > 0.0:
        k_const += confidence * math.log(confidence)
    if low > 0.0:
        k_const += (size - 1) * low * math.log(low)

    # Row tile: multiple of 8, bounded by rows-rounded-up-to-8 and by a VMEM
    # budget for the double-buffered logits tile (safe on v7x's 64 MiB VMEM).
    itemsize = xf.dtype.itemsize
    vmem_budget = 24 << 20
    tm_vmem = max(8, (vmem_budget // (2 * C * itemsize)) // 8 * 8)
    TM = min(int(tm), ((N + 7) // 8) * 8, int(tm_vmem))
    TM = max(8, (TM // 8) * 8)
    num_tiles = pl.cdiv(N, TM)

    # Double-buffered x tile dominates VMEM; headroom for tgt/out/f32 temps.
    vmem_bytes = int(2 * TM * C * itemsize * 1.5) + (4 << 20)
    vmem_bytes = max(vmem_bytes, 16 << 20)
    vmem_bytes = min(vmem_bytes, 100 << 20)

    kernel = functools.partial(
        _ls_loss_kernel,
        padding_idx=int(padding_idx),
        confidence=float(confidence),
        low=float(low),
        k_const=float(k_const),
        n_rows=int(N),
        tm=int(TM))

    partials = pl.pallas_call(
        kernel,
        out_shape=jax.ShapeDtypeStruct((num_tiles, 8, 128), jnp.float32),
        grid_spec=pltpu.PrefetchScalarGridSpec(
            num_scalar_prefetch=0,
            grid=(num_tiles,),
            in_specs=[pl.BlockSpec((TM, C), lambda i: (i, 0)),
                      pl.BlockSpec((TM, 1), lambda i: (i, 0))],
            out_specs=pl.BlockSpec((1, 8, 128), lambda i: (i, 0, 0))),
        compiler_params=pltpu.CompilerParams(
            dimension_semantics=("parallel",),
            vmem_limit_bytes=vmem_bytes),
    )(xf, tf)

    loss_sum = jnp.sum(partials[:, 0, 0])
    if normalize_length:
        denom = jnp.sum(tf[:, 0] != padding_idx).astype(jnp.float32)
    else:
        denom = jnp.float32(B)
    return loss_sum / denom


def _reference(x, target, *, size, padding_idx, smoothing, normalize_length):
    """Pure-JAX replica of the PyTorch forward for verification."""
    B, S, C = x.shape
    xf = x.reshape(-1, C).astype(jnp.float32)
    tf = target.reshape(-1)
    logp = jax.nn.log_softmax(xf, axis=1)
    ignore = tf == padding_idx
    t0 = jnp.where(ignore, 0, tf)
    low = smoothing / (size - 1)
    true_dist = jnp.full_like(xf, low).at[jnp.arange(xf.shape[0]), t0].set(1.0 - smoothing)
    kl = true_dist * (jnp.log(jnp.maximum(true_dist, 1e-38)) - logp)
    kl = jnp.where(ignore[:, None], 0.0, kl)
    denom = jnp.sum(~ignore).astype(jnp.float32) if normalize_length else jnp.float32(B)
    return jnp.sum(kl) / denom


if __name__ == "__main__":
    padding_idx = 0
    smoothing = 0.1

    key = jax.random.PRNGKey(0)

    # Test 1: small shape, single tile, normalize by batch.
    B, S, C = 2, 8, 32
    kx, kt, key = jax.random.split(key, 3)
    x = jax.random.normal(kx, (B, S, C), dtype=jnp.float32)
    target = jax.random.randint(kt, (B, S), 0, C, dtype=jnp.int32)
    target = target.at[0, 0].set(padding_idx).at[1, 3].set(padding_idx)

    loss = label_smoothing_loss(
        x, target, size=C, padding_idx=padding_idx,
        smoothing=smoothing, normalize_length=False)
    loss = jax.block_until_ready(loss)
    ref = _reference(x, target, size=C, padding_idx=padding_idx,
                     smoothing=smoothing, normalize_length=False)
    assert jnp.allclose(loss, ref, rtol=1e-5, atol=1e-5), (loss, ref)

    # Test 2: multi-tile with a remainder tile (N=40, TM=16 -> grid=3),
    # normalize by non-padded length.
    B2, S2 = 2, 20
    kx2, kt2, key = jax.random.split(key, 3)
    x2 = jax.random.normal(kx2, (B2, S2, C), dtype=jnp.float32)
    target2 = jax.random.randint(kt2, (B2, S2), 0, C, dtype=jnp.int32)
    target2 = target2.at[0, 5].set(padding_idx).at[1, 0].set(padding_idx)

    loss2 = label_smoothing_loss(
        x2, target2, size=C, padding_idx=padding_idx,
        smoothing=smoothing, normalize_length=True, tm=16)
    loss2 = jax.block_until_ready(loss2)
    ref2 = _reference(x2, target2, size=C, padding_idx=padding_idx,
                      smoothing=smoothing, normalize_length=True)
    assert jnp.allclose(loss2, ref2, rtol=1e-5, atol=1e-5), (loss2, ref2)

    # Test 3: bf16 logits, larger class count (not a multiple of 128).
    B3, S3, C3 = 2, 24, 200
    kx3, kt3 = jax.random.split(key)
    x3 = jax.random.normal(kx3, (B3, S3, C3), dtype=jnp.bfloat16)
    target3 = jax.random.randint(kt3, (B3, S3), 0, C3, dtype=jnp.int32)
    target3 = target3.at[0, 2].set(padding_idx)

    loss3 = label_smoothing_loss(
        x3, target3, size=C3, padding_idx=padding_idx,
        smoothing=smoothing, normalize_length=False)
    loss3 = jax.block_until_ready(loss3)
    ref3 = _reference(x3, target3, size=C3, padding_idx=padding_idx,
                      smoothing=smoothing, normalize_length=False)
    assert jnp.allclose(loss3, ref3, rtol=2e-2, atol=2e-2), (loss3, ref3)

    print("KERNEL_OK")
</pallas_src>

<mosaic_0001>
module attributes {stable_mosaic.version = 11 : i64} {
  func.func @_ls_loss_kernel(%arg0: i32, %arg1: memref<16x32xf32, #tpu.memory_space<vmem>>, %arg2: memref<16x1xi32, #tpu.memory_space<vmem>>, %arg3: memref<1x8x128xf32, #tpu.memory_space<vmem>>) attributes {dimension_semantics = [#tpu.dimension_semantics<parallel>], iteration_bounds = array<i64: 1>, scalar_prefetch = 0 : i64, scratch_operands = 0 : i64, tpu.core_type = #tpu.core_type<tc>, window_params = [{transform_indices = @transform_0, window_bounds = array<i64: 16, 32>}, {transform_indices = @transform_1, window_bounds = array<i64: 16, 1>}, {transform_indices = @transform_2, window_bounds = array<i64: 1, 8, 128>}]} {
    %c0 = arith.constant 0 : index
    %c0_0 = arith.constant 0 : index
    %0 = vector.load %arg1[%c0, %c0_0] : memref<16x32xf32, #tpu.memory_space<vmem>>, vector<16x32xf32>
    %c0_1 = arith.constant 0 : index
    %c0_2 = arith.constant 0 : index
    %1 = vector.load %arg2[%c0_1, %c0_2] : memref<16x1xi32, #tpu.memory_space<vmem>>, vector<16x1xi32>
    %cst = arith.constant dense<0xFF800000> : vector<16xf32>
    %2 = vector.multi_reduction <maximumf>, %0, %cst [1] : vector<16x32xf32> to vector<16xf32>
    %3 = vector.shape_cast %2 : vector<16xf32> to vector<16x1xf32>
    %4 = vector.broadcast %3 : vector<16x1xf32> to vector<16x32xf32>
    %5 = arith.subf %0, %4 : vector<16x32xf32>
    %6 = math.exp %5 : vector<16x32xf32>
    %cst_3 = arith.constant dense<0.000000e+00> : vector<16xf32>
    %7 = vector.multi_reduction <add>, %6, %cst_3 [1] : vector<16x32xf32> to vector<16xf32>
    %8 = vector.shape_cast %7 : vector<16xf32> to vector<16x1xf32>
    %9 = math.log %8 : vector<16x1xf32>
    %10 = tpu.iota {dimensions = array<i32: 1>} : vector<16x32xi32>
    %11 = vector.broadcast %1 : vector<16x1xi32> to vector<16x32xi32>
    %12 = arith.cmpi eq, %10, %11 : vector<16x32xi32>
    %cst_4 = arith.constant 0.899999976 : f32
    %cst_5 = arith.constant 0.0032258064 : f32
    %13 = vector.broadcast %cst_4 : f32 to vector<16x32xf32>
    %14 = vector.broadcast %cst_5 : f32 to vector<16x32xf32>
    %15 = arith.select %12, %13, %14 : vector<16x32xi1>, vector<16x32xf32>
    %16 = arith.mulf %15, %5 : vector<16x32xf32>
    %cst_6 = arith.constant dense<0.000000e+00> : vector<16xf32>
    %17 = vector.multi_reduction <add>, %16, %cst_6 [1] : vector<16x32xf32> to vector<16xf32>
    %18 = vector.shape_cast %17 : vector<16xf32> to vector<16x1xf32>
    %cst_7 = arith.constant -0.668481708 : f32
    %19 = vector.broadcast %cst_7 : f32 to vector<16x1xf32>
    %20 = arith.addf %19, %9 : vector<16x1xf32>
    %21 = arith.subf %20, %18 : vector<16x1xf32>
    %22 = tpu.iota {dimensions = array<i32: 0>} : vector<16x1xi32>
    %c16_i32 = arith.constant 16 : i32
    %23 = arith.muli %arg0, %c16_i32 : i32
    %24 = vector.broadcast %23 : i32 to vector<16x1xi32>
    %25 = arith.addi %22, %24 : vector<16x1xi32>
    %c16_i32_8 = arith.constant 16 : i32
    %26 = vector.broadcast %c16_i32_8 : i32 to vector<16x1xi32>
    %27 = arith.cmpi slt, %25, %26 : vector<16x1xi32>
    %c0_i32 = arith.constant 0 : i32
    %28 = vector.broadcast %c0_i32 : i32 to vector<16x1xi32>
    %29 = arith.cmpi ne, %1, %28 : vector<16x1xi32>
    %30 = arith.andi %27, %29 : vector<16x1xi1>
    %cst_9 = arith.constant 0.000000e+00 : f32
    %31 = vector.broadcast %cst_9 : f32 to vector<16x1xf32>
    %32 = arith.select %30, %21, %31 : vector<16x1xi1>, vector<16x1xf32>
    %33 = vector.shape_cast %32 : vector<16x1xf32> to vector<1x16x1xf32>
    %cst_10 = arith.constant dense<0.000000e+00> : vector<1xf32>
    %34 = vector.multi_reduction <add>, %33, %cst_10 [1, 2] : vector<1x16x1xf32> to vector<1xf32>
    %35 = vector.shape_cast %34 : vector<1xf32> to vector<1x1x1xf32>
    %36 = vector.extract %35[0, 0, 0] : f32 from vector<1x1x1xf32>
    %37 = vector.broadcast %36 : f32 to vector<1x8x128xf32>
    %c0_11 = arith.constant 0 : index
    %c0_12 = arith.constant 0 : index
    %c0_13 = arith.constant 0 : index
    %38 = vector.load %arg3[%c0_11, %c0_12, %c0_13] : memref<1x8x128xf32, #tpu.memory_space<vmem>>, vector<1x8x128xf32>
    tpu.vector_store %arg3[%c0_11, %c0_12, %c0_13], %37 {strides = array<i32>} : memref<1x8x128xf32, #tpu.memory_space<vmem>>, vector<1x8x128xf32>,
    return
  }
  func.func @transform_0(%arg0: i32) -> (i32, i32) {
    %c0_i32 = arith.constant 0 : i32
    %c0_i32_0 = arith.constant 0 : i32
    return %arg0, %c0_i32 : i32, i32
  }
  func.func @transform_1(%arg0: i32) -> (i32, i32) {
    %c0_i32 = arith.constant 0 : i32
    %c0_i32_0 = arith.constant 0 : i32
    return %arg0, %c0_i32 : i32, i32
  }
  func.func @transform_2(%arg0: i32) -> (i32, i32, i32) {
    %c0_i32 = arith.constant 0 : i32
    %c0_i32_0 = arith.constant 0 : i32
    %c0_i32_1 = arith.constant 0 : i32
    return %arg0, %c0_i32, %c0_i32_0 : i32, i32, i32
  }
}

</mosaic_0001>

<llo_original>
// kernel: tpu_custom_call.1
$region0: #{tpu_custom_call.1}
  #allocation0 [shape = 'u32[]', space=smem, size = 0x4, offset = 0x4, fixed_abs, tag = 'smem constant byte address 0x4 - core index']
  #allocation1 [shape = 'u32[72,128]{1,0:T(1,128)}', space=vmem, size = 0x9000, scoped, tag = 'internal scratch']
  %s0 = inlined_call_operand.vmem [shape: f32[16,32], index: 0, kind: input, shape index: {}]
  %s1 = inlined_call_operand.vmem [shape: s32[16,1], index: 1, kind: input, shape index: {}]
  %s2 = inlined_call_operand.hbm [shape: f32[1,8,128], index: 2, kind: output, shape index: {}]
  %s3 = sld [smem:[#allocation0]]
  $region18: #{tpu_custom_call.1} parent=0
    _
  %s5 = ssub.s32 1, %s3
  %s6 = scalar_select 0, %s5, %s3
  $region1: #{tpu_custom_call.1} parent=0
    #allocation2 [shape = 'u8[4096]{0}', space=vmem, size = 0x1000, scoped, tag = 'output window, operand 0, single buffered']
    #allocation3 [shape = 's32[1]{0}', space=sflag, size = 0x4, scoped, tag = 'scoped memory for tpu_custom_call.1']
    %7 = vsyncpa [#allocation3], 0
    // Predicated region
    $region2: #{tpu_custom_call.1} parent=1 // pred_check
      _
    $region3: #{tpu_custom_call.1} parent=1 // pred_check_branch
      %9 = sbr.rel (0) target = $region5
    $region4: #{tpu_custom_call.1} parent=1 // pred_region
      _
    $region5: #{tpu_custom_call.1} parent=1 // pred_fallthru
      _
    // Predicated region
    $region6: #{tpu_custom_call.1} parent=1 // pred_check
      _
    $region7: #{tpu_custom_call.1} parent=1 // pred_check_branch
      %11 = sbr.rel (0) target = $region9
    $region8: #{tpu_custom_call.1} parent=1 // pred_region
      _
    $region9: #{tpu_custom_call.1} parent=1 // pred_fallthru
      _
    %v12 = vld [vmem:[%s0] sm:$0xff]
    %v13 = vld [vmem:[%s0 + $0x8] sm:$0xff]
    %v14 = vld [vmem:[%s1] sm:$0xff]
    %v15 = vld [vmem:[%s1 + $0x8] sm:$0xff]
    %vm16 = vcmask 261120
    %v17 = vsel %vm16, %v12, -inf
    %18 = vmax.xlane.f32.xlu0 %v17
    %v19 = vpop.xlane.xlu0 %18
    %v20 = vsel %vm16, %v13, -inf
    %21 = vmax.xlane.f32.xlu0 %v20
    %v22 = vpop.xlane.xlu0 %21
    %v23 = vsub.f32 %v12, %v19
    %v24 = vsub.f32 %v13, %v22
    %v25 = vmul.f32 %v23, 1.442695
    %v26 = vpow.pop %v25
    %v27 = vmul.f32 %v24, 1.442695
    %v28 = vpow.pop %v27
    %v29 = vsel %vm16, %v26, 0.0
    %30 = vadd.xlane.f32.xlu0 %v29
    %v31 = vpop.xlane.xlu0 %30
    %v32 = vsel %vm16, %v28, 0.0
    %33 = vadd.xlane.f32.xlu0 %v32
    %v34 = vpop.xlane.xlu0 %33
    %v35 = vlog2.pop %v31
    %v36 = vmul.f32 %v35, 0.6931472
    %v37 = vlog2.pop %v34
    %v38 = vmul.f32 %v37, 0.6931472
    %v39 = vlaneseq
    %v40 = vand.u32 %v39, 127
    %41 = vset.pattern.permute.xlu0 0
    %42 = vperm.xlu0 %41, %v14
    %v43 = vpop.permute.xlu0 %42
    %44 = vset.pattern.permute.xlu0 0
    %45 = vperm.xlu0 %44, %v15
    %v46 = vpop.permute.xlu0 %45
    %vm47 = vcmp.eq.s32.totalorder %v40, %v43
    %vm48 = vcmp.eq.s32.totalorder %v40, %v46
    %v49 = vsel %vm47, 0.9, 0.0032258064
    %v50 = vsel %vm48, 0.9, 0.0032258064
    %v51 = vmul.f32 %v49, %v23
    %v52 = vmul.f32 %v50, %v24
    %v53 = vsel %vm16, %v51, 0.0
    %54 = vadd.xlane.f32.xlu0 %v53
    %v55 = vpop.xlane.xlu0 %54
    %v56 = vsel %vm16, %v52, 0.0
    %57 = vadd.xlane.f32.xlu0 %v56
    %v58 = vpop.xlane.xlu0 %57
    %v59 = vadd.f32 %v36, -0.6684817
    %v60 = vadd.f32 %v38, -0.6684817
    %v61 = vsub.f32 %v59, %v55
    %v62 = vsub.f32 %v60, %v58
    %v63 = vlaneseq
    %v64 = vshrl.u32 %v63, 7
    %v65 = vadd.s32 %v64, 8
    %s66 = smul.u32 0, 16
    %v67 = vstv %s66
    %v68 = vadd.s32 %v64, %v67
    %v69 = vadd.s32 %v65, %v67
    %vm70 = vcmp.lt.s32.totalorder %v68, 16
    %vm71 = vcmp.lt.s32.totalorder %v69, 16
    %vm72 = vcmp.ne.s32.totalorder %v14, 0
    %vm73 = vcmp.ne.s32.totalorder %v15, 0
    %vm74 = vmand %vm70, %vm72
    %vm75 = vmand %vm71, %vm73
    %v76 = vsel %vm74, %v61, 0.0
    %v77 = vsel %vm75, %v62, 0.0
    %vm78 = vcmask 7168
    %v79 = vsel %vm78, %v76, 0.0
    %v80 = vsel %vm78, %v77, 0.0
    %v81 = vadd.f32 %v79, %v80
    %82 = vadd.xlane.f32.xlu0 %v81
    %v83 = vpop.xlane.xlu0 %82
    %v84 = vrot.slane %v83, 4
    %v85 = vadd.f32 %v83, %v84
    %v86 = vrot.slane %v85, 2
    %v87 = vadd.f32 %v85, %v86
    %v88 = vrot.slane %v87, 1
    %v89 = vadd.f32 %v87, %v88
    %s90 = vtos %v89
    %v91 = vstv %s90
    %92 = vst [vmem:[#allocation2] sm:$0xff] %v91
    // Predicated region
    $region10: #{tpu_custom_call.1} parent=1 // pred_check
      _
    $region11: #{tpu_custom_call.1} parent=1 // pred_check_branch
      %94 = sbr.rel (0) target = $region13
    $region12: #{tpu_custom_call.1} parent=1 // pred_region
      %96 = vsyncadd [#allocation3], 0
      %s98 = sshll.u32 [#allocation2], 4
      %s99 = int_to_ptr.vmem [resolvable:$true] %s98
      %s100 = sshll.u32 %s2, 4
      %s101 = int_to_ptr.hbm [resolvable:$true] %s100
      %103 = dma.vmem_to_hbm [thread:$0]  %s99, 128, %s101, [#allocation3]
    $region13: #{tpu_custom_call.1} parent=1 // pred_fallthru
      _
    // Predicated region
    $region14: #{tpu_custom_call.1} parent=1 // pred_check
      _
    $region15: #{tpu_custom_call.1} parent=1 // pred_check_branch
      %105 = sbr.rel (0) target = $region17
    $region16: #{tpu_custom_call.1} parent=1 // pred_region
      %107 = dma.done [#allocation3], 128
    $region17: #{tpu_custom_call.1} parent=1 // pred_fallthru
      _
    %108 = vsyncpa [#allocation3], 1

</llo_original>
